<compile_context>
chip_gen: v6e
topology: v6e:2x2x1
jax: 0.10.0
libtpu: 0.0.40
codegen_flags: <defaults>
</compile_context>

<pallas_src>
import functools

import jax
import jax.numpy as jnp
from jax.experimental import pallas as pl
from jax.experimental.pallas import tpu as pltpu

INPUT_SIZE = 28 * 28   # 784
FC1_SIZE = 256
FC2_SIZE = 64
OUTPUT_SIZE = 10

K_PAD = 896            # 7 * 128 : lane-aligned padded input feature dim
H2_PAD = 128           # lane-aligned padded hidden-2 dim (real = 64)
OUT_PAD = 128          # lane-dense output slab; real logits are [:, :10]


def _round_up(x, m):
    return (x + m - 1) // m * m


def mlp_kernel(x_ref, w1_ref, b1_ref, w2_ref, b2_ref, w3_ref, b3_ref, o_ref):
    # One batch tile per grid step.  Weights/biases map to the same block
    # every step (VMEM-resident); x / out tiles are double-buffered by the
    # Pallas pipeline so the x DMA overlaps the MXU work of the previous tile.
    x = x_ref[...]                                          # bf16 [TB, 896]
    h1 = jnp.dot(x, w1_ref[...], preferred_element_type=jnp.float32)
    h1 = jnp.maximum(h1 + b1_ref[...], 0.0)                 # f32  [TB, 256]
    h2 = jnp.dot(h1.astype(jnp.bfloat16), w2_ref[...],
                 preferred_element_type=jnp.float32)
    h2 = jnp.maximum(h2 + b2_ref[...], 0.0)                 # f32  [TB, 128]
    out = jnp.dot(h2.astype(jnp.bfloat16), w3_ref[...],
                  preferred_element_type=jnp.float32)
    o_ref[...] = (out + b3_ref[...]).astype(o_ref.dtype)    # f32  [TB, 128]


@functools.partial(jax.jit, static_argnames=())
def neural_network_forward(x, params):
    """x: any array whose trailing elements flatten to 784 per row (e.g. NCHW
    [B, 1, 28, 28]).  Returns f32 logits [B, 10], matching PyTorch forward."""
    w1, b1, w2, b2, w3, b3 = params
    x2d = x.reshape(-1, INPUT_SIZE)
    B = x2d.shape[0]

    # Batch tile: multiple of 16 (bf16 sublane packing), capped at 512.
    TB = min(512, _round_up(B, 16))
    B_pad = _round_up(B, TB)

    # Cast / zero-pad for bf16 MXU + lane alignment (padding contributes 0).
    xp = jnp.zeros((B_pad, K_PAD), jnp.bfloat16)
    xp = xp.at[:B, :INPUT_SIZE].set(x2d.astype(jnp.bfloat16))

    w1p = jnp.zeros((K_PAD, FC1_SIZE), jnp.bfloat16)
    w1p = w1p.at[:INPUT_SIZE, :].set(w1.astype(jnp.bfloat16))
    b1f = b1.astype(jnp.float32)

    w2p = jnp.zeros((FC1_SIZE, H2_PAD), jnp.bfloat16)
    w2p = w2p.at[:, :FC2_SIZE].set(w2.astype(jnp.bfloat16))
    b2p = jnp.zeros((1, H2_PAD), jnp.float32)
    b2p = b2p.at[:, :FC2_SIZE].set(b2.astype(jnp.float32))

    w3p = jnp.zeros((H2_PAD, OUT_PAD), jnp.bfloat16)
    w3p = w3p.at[:FC2_SIZE, :OUTPUT_SIZE].set(w3.astype(jnp.bfloat16))
    b3p = jnp.zeros((1, OUT_PAD), jnp.float32)
    b3p = b3p.at[:, :OUTPUT_SIZE].set(b3.astype(jnp.float32))

    grid = (B_pad // TB,)
    # Weights/biases: full block, same index every grid step -> VMEM-resident.
    resident = lambda arr: pl.BlockSpec(arr.shape, lambda i: (0,) * arr.ndim)

    out = pl.pallas_call(
        mlp_kernel,
        out_shape=jax.ShapeDtypeStruct((B_pad, OUT_PAD), jnp.float32),
        grid=grid,
        in_specs=[
            pl.BlockSpec((TB, K_PAD), lambda i: (i, 0)),   # x tile
            resident(w1p), resident(b1f),
            resident(w2p), resident(b2p),
            resident(w3p), resident(b3p),
        ],
        out_specs=pl.BlockSpec((TB, OUT_PAD), lambda i: (i, 0)),
        compiler_params=pltpu.CompilerParams(
            dimension_semantics=("parallel",)),
    )(xp, w1p, b1f, w2p, b2p, w3p, b3p)

    return out[:B, :OUTPUT_SIZE]


def init_params():
    """Deterministic parameter init (nn.Linear shapes, stored as [in, out])."""
    key = jax.random.PRNGKey(42)
    k1, k2, k3, k4, k5, k6 = jax.random.split(key, 6)

    def kaiming_uniform(k, fan_in, shape):
        bound = 1.0 / jnp.sqrt(fan_in)
        return jax.random.uniform(k, shape, jnp.float32, -bound, bound)

    w1 = kaiming_uniform(k1, INPUT_SIZE, (INPUT_SIZE, FC1_SIZE))
    b1 = kaiming_uniform(k2, INPUT_SIZE, (1, FC1_SIZE))
    w2 = kaiming_uniform(k3, FC1_SIZE, (FC1_SIZE, FC2_SIZE))
    b2 = kaiming_uniform(k4, FC1_SIZE, (1, FC2_SIZE))
    w3 = kaiming_uniform(k5, FC2_SIZE, (FC2_SIZE, OUTPUT_SIZE))
    b3 = kaiming_uniform(k6, FC2_SIZE, (1, OUTPUT_SIZE))
    return (w1, b1, w2, b2, w3, b3)


def reference_forward_bf16(x, params):
    """Reference matching the kernel's numerics: bf16 operands, f32 accum."""
    w1, b1, w2, b2, w3, b3 = params
    x = x.reshape(-1, INPUT_SIZE).astype(jnp.bfloat16)
    h1 = jnp.maximum(
        jnp.dot(x, w1.astype(jnp.bfloat16),
                preferred_element_type=jnp.float32) + b1, 0.0)
    h2 = jnp.maximum(
        jnp.dot(h1.astype(jnp.bfloat16), w2.astype(jnp.bfloat16),
                preferred_element_type=jnp.float32) + b2, 0.0)
    return jnp.dot(h2.astype(jnp.bfloat16), w3.astype(jnp.bfloat16),
                   preferred_element_type=jnp.float32) + b3


def reference_forward_f32(x, params):
    w1, b1, w2, b2, w3, b3 = params
    x = x.reshape(-1, INPUT_SIZE).astype(jnp.float32)
    h1 = jnp.maximum(x @ w1 + b1, 0.0)
    h2 = jnp.maximum(h1 @ w2 + b2, 0.0)
    return h2 @ w3 + b3


if __name__ == "__main__":
    params = init_params()
    # Small MNIST-like batch: NCHW [2, 1, 28, 28]
    x = jax.random.normal(jax.random.PRNGKey(0), (2, 1, 28, 28), jnp.float32)

    out = neural_network_forward(x, params)
    out = jax.block_until_ready(out)
    assert out.shape == (2, OUTPUT_SIZE), out.shape

    # Tight check against a reference with matching bf16-MXU numerics.
    ref_bf16 = reference_forward_bf16(x, params)
    assert jnp.allclose(out, ref_bf16, atol=2e-2, rtol=2e-2), (
        float(jnp.max(jnp.abs(out - ref_bf16))))
    # Loose sanity check against the full-f32 reference.
    ref_f32 = reference_forward_f32(x, params)
    assert jnp.allclose(out, ref_f32, atol=5e-2, rtol=5e-2), (
        float(jnp.max(jnp.abs(out - ref_f32))))
    print("KERNEL_OK")
</pallas_src>

<mosaic_0001>
module attributes {stable_mosaic.version = 11 : i64} {
  func.func @mlp_kernel(%arg0: i32, %arg1: memref<16x896xbf16, #tpu.memory_space<vmem>>, %arg2: memref<896x256xbf16, #tpu.memory_space<vmem>>, %arg3: memref<1x256xf32, #tpu.memory_space<vmem>>, %arg4: memref<256x128xbf16, #tpu.memory_space<vmem>>, %arg5: memref<1x128xf32, #tpu.memory_space<vmem>>, %arg6: memref<128x128xbf16, #tpu.memory_space<vmem>>, %arg7: memref<1x128xf32, #tpu.memory_space<vmem>>, %arg8: memref<16x128xf32, #tpu.memory_space<vmem>>) attributes {dimension_semantics = [#tpu.dimension_semantics<parallel>], iteration_bounds = array<i64: 1>, scalar_prefetch = 0 : i64, scratch_operands = 0 : i64, tpu.core_type = #tpu.core_type<tc>, window_params = [{transform_indices = @transform_0, window_bounds = array<i64: 16, 896>}, {pipeline_mode = #tpu.pipeline_mode<synchronous>, transform_indices = @transform_1, window_bounds = array<i64: 896, 256>}, {pipeline_mode = #tpu.pipeline_mode<synchronous>, transform_indices = @transform_2, window_bounds = array<i64: 1, 256>}, {pipeline_mode = #tpu.pipeline_mode<synchronous>, transform_indices = @transform_3, window_bounds = array<i64: 256, 128>}, {pipeline_mode = #tpu.pipeline_mode<synchronous>, transform_indices = @transform_4, window_bounds = array<i64: 1, 128>}, {pipeline_mode = #tpu.pipeline_mode<synchronous>, transform_indices = @transform_5, window_bounds = array<i64: 128, 128>}, {pipeline_mode = #tpu.pipeline_mode<synchronous>, transform_indices = @transform_6, window_bounds = array<i64: 1, 128>}, {transform_indices = @transform_7, window_bounds = array<i64: 16, 128>}]} {
    %c0 = arith.constant 0 : index
    %c0_0 = arith.constant 0 : index
    %0 = vector.load %arg1[%c0, %c0_0] : memref<16x896xbf16, #tpu.memory_space<vmem>>, vector<16x896xbf16>
    %c0_1 = arith.constant 0 : index
    %c0_2 = arith.constant 0 : index
    %1 = vector.load %arg2[%c0_1, %c0_2] : memref<896x256xbf16, #tpu.memory_space<vmem>>, vector<896x256xbf16>
    %cst = arith.constant dense<0.000000e+00> : vector<16x256xf32>
    %2 = tpu.matmul %0, %1, %cst {dimension_numbers = #tpu.dot_dimension_numbers<[1], [0], [0], [1], [0, 0, 1, 1], [], []>} : vector<16x896xbf16>, vector<896x256xbf16>, vector<16x256xf32> -> vector<16x256xf32>
    %c0_3 = arith.constant 0 : index
    %c0_4 = arith.constant 0 : index
    %3 = vector.load %arg3[%c0_3, %c0_4] : memref<1x256xf32, #tpu.memory_space<vmem>>, vector<1x256xf32>
    %4 = vector.broadcast %3 : vector<1x256xf32> to vector<16x256xf32>
    %5 = arith.addf %2, %4 : vector<16x256xf32>
    %cst_5 = arith.constant 0.000000e+00 : f32
    %6 = vector.broadcast %cst_5 : f32 to vector<16x256xf32>
    %7 = arith.maximumf %5, %6 : vector<16x256xf32>
    %8 = arith.truncf %7 : vector<16x256xf32> to vector<16x256xbf16>
    %c0_6 = arith.constant 0 : index
    %c0_7 = arith.constant 0 : index
    %9 = vector.load %arg4[%c0_6, %c0_7] : memref<256x128xbf16, #tpu.memory_space<vmem>>, vector<256x128xbf16>
    %cst_8 = arith.constant dense<0.000000e+00> : vector<16x128xf32>
    %10 = tpu.matmul %8, %9, %cst_8 {dimension_numbers = #tpu.dot_dimension_numbers<[1], [0], [0], [1], [0, 0, 1, 1], [], []>} : vector<16x256xbf16>, vector<256x128xbf16>, vector<16x128xf32> -> vector<16x128xf32>
    %c0_9 = arith.constant 0 : index
    %c0_10 = arith.constant 0 : index
    %11 = vector.load %arg5[%c0_9, %c0_10] : memref<1x128xf32, #tpu.memory_space<vmem>>, vector<1x128xf32>
    %12 = vector.broadcast %11 : vector<1x128xf32> to vector<16x128xf32>
    %13 = arith.addf %10, %12 : vector<16x128xf32>
    %cst_11 = arith.constant 0.000000e+00 : f32
    %14 = vector.broadcast %cst_11 : f32 to vector<16x128xf32>
    %15 = arith.maximumf %13, %14 : vector<16x128xf32>
    %16 = arith.truncf %15 : vector<16x128xf32> to vector<16x128xbf16>
    %c0_12 = arith.constant 0 : index
    %c0_13 = arith.constant 0 : index
    %17 = vector.load %arg6[%c0_12, %c0_13] : memref<128x128xbf16, #tpu.memory_space<vmem>>, vector<128x128xbf16>
    %cst_14 = arith.constant dense<0.000000e+00> : vector<16x128xf32>
    %18 = tpu.matmul %16, %17, %cst_14 {dimension_numbers = #tpu.dot_dimension_numbers<[1], [0], [0], [1], [0, 0, 1, 1], [], []>} : vector<16x128xbf16>, vector<128x128xbf16>, vector<16x128xf32> -> vector<16x128xf32>
    %c0_15 = arith.constant 0 : index
    %c0_16 = arith.constant 0 : index
    %19 = vector.load %arg7[%c0_15, %c0_16] : memref<1x128xf32, #tpu.memory_space<vmem>>, vector<1x128xf32>
    %20 = vector.broadcast %19 : vector<1x128xf32> to vector<16x128xf32>
    %21 = arith.addf %18, %20 : vector<16x128xf32>
    %c0_17 = arith.constant 0 : index
    %c0_18 = arith.constant 0 : index
    %22 = vector.load %arg8[%c0_17, %c0_18] : memref<16x128xf32, #tpu.memory_space<vmem>>, vector<16x128xf32>
    tpu.vector_store %arg8[%c0_17, %c0_18], %21 {strides = array<i32>} : memref<16x128xf32, #tpu.memory_space<vmem>>, vector<16x128xf32>,
    return
  }
  func.func @transform_0(%arg0: i32) -> (i32, i32) {
    %c0_i32 = arith.constant 0 : i32
    %c0_i32_0 = arith.constant 0 : i32
    return %arg0, %c0_i32 : i32, i32
  }
  func.func @transform_1(%arg0: i32) -> (i32, i32) {
    %c0_i32 = arith.constant 0 : i32
    %c0_i32_0 = arith.constant 0 : i32
    %c0_i32_1 = arith.constant 0 : i32
    return %c0_i32, %c0_i32_0 : i32, i32
  }
  func.func @transform_2(%arg0: i32) -> (i32, i32) {
    %c0_i32 = arith.constant 0 : i32
    %c0_i32_0 = arith.constant 0 : i32
    %c0_i32_1 = arith.constant 0 : i32
    return %c0_i32, %c0_i32_0 : i32, i32
  }
  func.func @transform_3(%arg0: i32) -> (i32, i32) {
    %c0_i32 = arith.constant 0 : i32
    %c0_i32_0 = arith.constant 0 : i32
    %c0_i32_1 = arith.constant 0 : i32
    return %c0_i32, %c0_i32_0 : i32, i32
  }
  func.func @transform_4(%arg0: i32) -> (i32, i32) {
    %c0_i32 = arith.constant 0 : i32
    %c0_i32_0 = arith.constant 0 : i32
    %c0_i32_1 = arith.constant 0 : i32
    return %c0_i32, %c0_i32_0 : i32, i32
  }
  func.func @transform_5(%arg0: i32) -> (i32, i32) {
    %c0_i32 = arith.constant 0 : i32
    %c0_i32_0 = arith.constant 0 : i32
    %c0_i32_1 = arith.constant 0 : i32
    return %c0_i32, %c0_i32_0 : i32, i32
  }
  func.func @transform_6(%arg0: i32) -> (i32, i32) {
    %c0_i32 = arith.constant 0 : i32
    %c0_i32_0 = arith.constant 0 : i32
    %c0_i32_1 = arith.constant 0 : i32
    return %c0_i32, %c0_i32_0 : i32, i32
  }
  func.func @transform_7(%arg0: i32) -> (i32, i32) {
    %c0_i32 = arith.constant 0 : i32
    %c0_i32_0 = arith.constant 0 : i32
    return %arg0, %c0_i32 : i32, i32
  }
}

</mosaic_0001>

<llo_original>
// kernel: neural_network_forward.1
$region0: #{neural_network_forward.1}
  #allocation0 [shape = 'u32[]', space=smem, size = 0x4, offset = 0x4, fixed_abs, tag = 'smem constant byte address 0x4 - core index']
  #allocation1 [shape = 'u32[144,128]{1,0:T(1,128)}', space=vmem, size = 0x12000, scoped, tag = 'internal scratch']
  %s0 = inlined_call_operand.vmem [shape: bf16[16,896], index: 0, kind: input, shape index: {}]
  %s1 = inlined_call_operand.vmem [shape: bf16[896,256], index: 1, kind: input, shape index: {}]
  %s2 = inlined_call_operand.vmem [shape: f32[1,256], index: 2, kind: input, shape index: {}]
  %s3 = inlined_call_operand.vmem [shape: bf16[256,128], index: 3, kind: input, shape index: {}]
  %s4 = inlined_call_operand.vmem [shape: f32[1,128], index: 4, kind: input, shape index: {}]
  %s5 = inlined_call_operand.vmem [shape: bf16[128,128], index: 5, kind: input, shape index: {}]
  %s6 = inlined_call_operand.vmem [shape: f32[1,128], index: 6, kind: input, shape index: {}]
  %s7 = inlined_call_operand.vmem [shape: f32[16,128], index: 7, kind: output, shape index: {}]
  %s8 = sld [smem:[#allocation0]]
  $region38: #{neural_network_forward.1} parent=0
    _
  %s10 = ssub.s32 1, %s8
  %s11 = scalar_select 0, %s10, %s8
  // Predicated region
  $region2: #{neural_network_forward.1} parent=0 // pred_check
    _
  $region3: #{neural_network_forward.1} parent=0 // pred_check_branch
    %13 = sbr.rel (0) target = $region5
  $region4: #{neural_network_forward.1} parent=0 // pred_region
    _
  $region5: #{neural_network_forward.1} parent=0 // pred_fallthru
    _
  // Predicated region
  $region6: #{neural_network_forward.1} parent=0 // pred_check
    _
  $region7: #{neural_network_forward.1} parent=0 // pred_check_branch
    %15 = sbr.rel (0) target = $region9
  $region8: #{neural_network_forward.1} parent=0 // pred_region
    _
  $region9: #{neural_network_forward.1} parent=0 // pred_fallthru
    _
  // Predicated region
  $region10: #{neural_network_forward.1} parent=0 // pred_check
    _
  $region11: #{neural_network_forward.1} parent=0 // pred_check_branch
    %17 = sbr.rel (0) target = $region13
  $region12: #{neural_network_forward.1} parent=0 // pred_region
    _
  $region13: #{neural_network_forward.1} parent=0 // pred_fallthru
    _
  // Predicated region
  $region14: #{neural_network_forward.1} parent=0 // pred_check
    _
  $region15: #{neural_network_forward.1} parent=0 // pred_check_branch
    %19 = sbr.rel (0) target = $region17
  $region16: #{neural_network_forward.1} parent=0 // pred_region
    _
  $region17: #{neural_network_forward.1} parent=0 // pred_fallthru
    _
  // Predicated region
  $region18: #{neural_network_forward.1} parent=0 // pred_check
    _
  $region19: #{neural_network_forward.1} parent=0 // pred_check_branch
    %21 = sbr.rel (0) target = $region21
  $region20: #{neural_network_forward.1} parent=0 // pred_region
    _
  $region21: #{neural_network_forward.1} parent=0 // pred_fallthru
    _
  // Predicated region
  $region22: #{neural_network_forward.1} parent=0 // pred_check
    _
  $region23: #{neural_network_forward.1} parent=0 // pred_check_branch
    %23 = sbr.rel (0) target = $region25
  $region24: #{neural_network_forward.1} parent=0 // pred_region
    _
  $region25: #{neural_network_forward.1} parent=0 // pred_fallthru
    _
  // Predicated region
  $region26: #{neural_network_forward.1} parent=0 // pred_check
    _
  $region27: #{neural_network_forward.1} parent=0 // pred_check_branch
    %25 = sbr.rel (0) target = $region29
  $region28: #{neural_network_forward.1} parent=0 // pred_region
    _
  $region29: #{neural_network_forward.1} parent=0 // pred_fallthru
    _
  %v27 = vld [vmem:[%s0] sm:$0xff]
  %v28 = vld [vmem:[%s0 + $0x8] sm:$0xff]
  %v29 = vld [vmem:[%s0 + $0x10] sm:$0xff]
  %v30 = vld [vmem:[%s0 + $0x18] sm:$0xf]
  %v31 = vld [vmem:[%s0 + $0x1c] sm:$0xff]
  %v32 = vld [vmem:[%s0 + $0x24] sm:$0xff]
  %v33 = vld [vmem:[%s0 + $0x2c] sm:$0xff]
  %v34 = vld [vmem:[%s0 + $0x34] sm:$0xf]
  %v35 = vld [vmem:[%s1] sm:$0xff]
  %v36 = vld [vmem:[%s1 + $0x8] sm:$0xff]
  %v37 = vld [vmem:[%s1 + $0x10] sm:$0xff]
  %v38 = vld [vmem:[%s1 + $0x18] sm:$0xff]
  %v39 = vld [vmem:[%s1 + $0x20] sm:$0xff]
  %v40 = vld [vmem:[%s1 + $0x28] sm:$0xff]
  %v41 = vld [vmem:[%s1 + $0x30] sm:$0xff]
  %v42 = vld [vmem:[%s1 + $0x38] sm:$0xff]
  %v43 = vld [vmem:[%s1 + $0x40] sm:$0xff]
  %v44 = vld [vmem:[%s1 + $0x48] sm:$0xff]
  %v45 = vld [vmem:[%s1 + $0x50] sm:$0xff]
  %v46 = vld [vmem:[%s1 + $0x58] sm:$0xff]
  %v47 = vld [vmem:[%s1 + $0x60] sm:$0xff]
  %v48 = vld [vmem:[%s1 + $0x68] sm:$0xff]
  %v49 = vld [vmem:[%s1 + $0x70] sm:$0xff]
  %v50 = vld [vmem:[%s1 + $0x78] sm:$0xff]
  %v51 = vld [vmem:[%s1 + $0x80] sm:$0xff]
  %v52 = vld [vmem:[%s1 + $0x88] sm:$0xff]
  %v53 = vld [vmem:[%s1 + $0x90] sm:$0xff]
  %v54 = vld [vmem:[%s1 + $0x98] sm:$0xff]
  %v55 = vld [vmem:[%s1 + $0xa0] sm:$0xff]
  %v56 = vld [vmem:[%s1 + $0xa8] sm:$0xff]
  %v57 = vld [vmem:[%s1 + $0xb0] sm:$0xff]
  %v58 = vld [vmem:[%s1 + $0xb8] sm:$0xff]
  %v59 = vld [vmem:[%s1 + $0xc0] sm:$0xff]
  %v60 = vld [vmem:[%s1 + $0xc8] sm:$0xff]
  %v61 = vld [vmem:[%s1 + $0xd0] sm:$0xff]
  %v62 = vld [vmem:[%s1 + $0xd8] sm:$0xff]
  %v63 = vld [vmem:[%s1 + $0xe0] sm:$0xff]
  %v64 = vld [vmem:[%s1 + $0xe8] sm:$0xff]
  %v65 = vld [vmem:[%s1 + $0xf0] sm:$0xff]
  %v66 = vld [vmem:[%s1 + $0xf8] sm:$0xff]
  %v67 = vld [vmem:[%s1 + $0x100] sm:$0xff]
  %v68 = vld [vmem:[%s1 + $0x108] sm:$0xff]
  %v69 = vld [vmem:[%s1 + $0x110] sm:$0xff]
  %v70 = vld [vmem:[%s1 + $0x118] sm:$0xff]
  %v71 = vld [vmem:[%s1 + $0x120] sm:$0xff]
  %v72 = vld [vmem:[%s1 + $0x128] sm:$0xff]
  %v73 = vld [vmem:[%s1 + $0x130] sm:$0xff]
  %v74 = vld [vmem:[%s1 + $0x138] sm:$0xff]
  %v75 = vld [vmem:[%s1 + $0x140] sm:$0xff]
  %v76 = vld [vmem:[%s1 + $0x148] sm:$0xff]
  %v77 = vld [vmem:[%s1 + $0x150] sm:$0xff]
  %v78 = vld [vmem:[%s1 + $0x158] sm:$0xff]
  %v79 = vld [vmem:[%s1 + $0x160] sm:$0xff]
  %v80 = vld [vmem:[%s1 + $0x168] sm:$0xff]
  %v81 = vld [vmem:[%s1 + $0x170] sm:$0xff]
  %v82 = vld [vmem:[%s1 + $0x178] sm:$0xff]
  %v83 = vld [vmem:[%s1 + $0x180] sm:$0xff]
  %v84 = vld [vmem:[%s1 + $0x188] sm:$0xff]
  %v85 = vld [vmem:[%s1 + $0x190] sm:$0xff]
  %v86 = vld [vmem:[%s1 + $0x198] sm:$0xff]
  %v87 = vld [vmem:[%s1 + $0x1a0] sm:$0xff]
  %v88 = vld [vmem:[%s1 + $0x1a8] sm:$0xff]
  %v89 = vld [vmem:[%s1 + $0x1b0] sm:$0xff]
  %v90 = vld [vmem:[%s1 + $0x1b8] sm:$0xff]
  %v91 = vld [vmem:[%s1 + $0x1c0] sm:$0xff]
  %v92 = vld [vmem:[%s1 + $0x1c8] sm:$0xff]
  %v93 = vld [vmem:[%s1 + $0x1d0] sm:$0xff]
  %v94 = vld [vmem:[%s1 + $0x1d8] sm:$0xff]
  %v95 = vld [vmem:[%s1 + $0x1e0] sm:$0xff]
  %v96 = vld [vmem:[%s1 + $0x1e8] sm:$0xff]
  %v97 = vld [vmem:[%s1 + $0x1f0] sm:$0xff]
  %v98 = vld [vmem:[%s1 + $0x1f8] sm:$0xff]
  %v99 = vld [vmem:[%s1 + $0x200] sm:$0xff]
  %v100 = vld [vmem:[%s1 + $0x208] sm:$0xff]
  %v101 = vld [vmem:[%s1 + $0x210] sm:$0xff]
  %v102 = vld [vmem:[%s1 + $0x218] sm:$0xff]
  %v103 = vld [vmem:[%s1 + $0x220] sm:$0xff]
  %v104 = vld [vmem:[%s1 + $0x228] sm:$0xff]
  %v105 = vld [vmem:[%s1 + $0x230] sm:$0xff]
  %v106 = vld [vmem:[%s1 + $0x238] sm:$0xff]
  %v107 = vld [vmem:[%s1 + $0x240] sm:$0xff]
  %v108 = vld [vmem:[%s1 + $0x248] sm:$0xff]
  %v109 = vld [vmem:[%s1 + $0x250] sm:$0xff]
  %v110 = vld [vmem:[%s1 + $0x258] sm:$0xff]
  %v111 = vld [vmem:[%s1 + $0x260] sm:$0xff]
  %v112 = vld [vmem:[%s1 + $0x268] sm:$0xff]
  %v113 = vld [vmem:[%s1 + $0x270] sm:$0xff]
  %v114 = vld [vmem:[%s1 + $0x278] sm:$0xff]
  %v115 = vld [vmem:[%s1 + $0x280] sm:$0xff]
  %v116 = vld [vmem:[%s1 + $0x288] sm:$0xff]
  %v117 = vld [vmem:[%s1 + $0x290] sm:$0xff]
  %v118 = vld [vmem:[%s1 + $0x298] sm:$0xff]
  %v119 = vld [vmem:[%s1 + $0x2a0] sm:$0xff]
  %v120 = vld [vmem:[%s1 + $0x2a8] sm:$0xff]
  %v121 = vld [vmem:[%s1 + $0x2b0] sm:$0xff]
  %v122 = vld [vmem:[%s1 + $0x2b8] sm:$0xff]
  %v123 = vld [vmem:[%s1 + $0x2c0] sm:$0xff]
  %v124 = vld [vmem:[%s1 + $0x2c8] sm:$0xff]
  %v125 = vld [vmem:[%s1 + $0x2d0] sm:$0xff]
  %v126 = vld [vmem:[%s1 + $0x2d8] sm:$0xff]
  %v127 = vld [vmem:[%s1 + $0x2e0] sm:$0xff]
  %v128 = vld [vmem:[%s1 + $0x2e8] sm:$0xff]
  %v129 = vld [vmem:[%s1 + $0x2f0] sm:$0xff]
  %v130 = vld [vmem:[%s1 + $0x2f8] sm:$0xff]
  %v131 = vld [vmem:[%s1 + $0x300] sm:$0xff]
  %v132 = vld [vmem:[%s1 + $0x308] sm:$0xff]
  %v133 = vld [vmem:[%s1 + $0x310] sm:$0xff]
  %v134 = vld [vmem:[%s1 + $0x318] sm:$0xff]
  %v135 = vld [vmem:[%s1 + $0x320] sm:$0xff]
  %v136 = vld [vmem:[%s1 + $0x328] sm:$0xff]
  %v137 = vld [vmem:[%s1 + $0x330] sm:$0xff]
  %v138 = vld [vmem:[%s1 + $0x338] sm:$0xff]
  %v139 = vld [vmem:[%s1 + $0x340] sm:$0xff]
  %v140 = vld [vmem:[%s1 + $0x348] sm:$0xff]
  %v141 = vld [vmem:[%s1 + $0x350] sm:$0xff]
  %v142 = vld [vmem:[%s1 + $0x358] sm:$0xff]
  %v143 = vld [vmem:[%s1 + $0x360] sm:$0xff]
  %v144 = vld [vmem:[%s1 + $0x368] sm:$0xff]
  %v145 = vld [vmem:[%s1 + $0x370] sm:$0xff]
  %v146 = vld [vmem:[%s1 + $0x378] sm:$0xff]
  %v147 = vld [vmem:[%s2] sm:$0x3]
  %v149 = vlaneseq
  %v150 = vshrl.u32 %v149, 7
  %v151 = vsub.s32 0, %v150
  %v152 = vrot.slane %v147, %v151
  %v153 = vlaneseq
  %v154 = vshrl.u32 %v153, 7
  %v155 = vsub.s32 1, %v154
  %v156 = vrot.slane %v147, %v155
  %v167 = vunpack.c.l.b16 %v27
  %v168 = vunpack.c.h.b16 %v27
  %v169 = vunpack.c.l.b16 %v28
  %v170 = vunpack.c.h.b16 %v28
  %v171 = vunpack.c.l.b16 %v29
  %v172 = vunpack.c.h.b16 %v29
  %v173 = vunpack.c.l.b16 %v30
  %v174 = vunpack.c.l.b16 %v31
  %v175 = vunpack.c.h.b16 %v31
  %v176 = vunpack.c.l.b16 %v32
  %v177 = vunpack.c.h.b16 %v32
  %v178 = vunpack.c.l.b16 %v33
  %v179 = vunpack.c.h.b16 %v33
  %v180 = vunpack.c.l.b16 %v34
  %v181 = vpack.c.b16 %v174, %v167
  %v182 = vpack.c.b16 %v175, %v168
  %v183 = vpack.c.b16 %v176, %v169
  %v184 = vpack.c.b16 %v177, %v170
  %v185 = vpack.c.b16 %v178, %v171
  %v186 = vpack.c.b16 %v179, %v172
  %v187 = vpack.c.b16 %v180, %v173
  %v307 = vunpack.c.l.b16 %v35
  %v308 = vunpack.c.h.b16 %v35
  %v309 = vunpack.c.l.b16 %v36
  %v310 = vunpack.c.h.b16 %v36
  %v311 = vunpack.c.l.b16 %v37
  %v312 = vunpack.c.h.b16 %v37
  %v313 = vunpack.c.l.b16 %v38
  %v314 = vunpack.c.h.b16 %v38
  %v315 = vunpack.c.l.b16 %v39
  %v316 = vunpack.c.h.b16 %v39
  %v317 = vunpack.c.l.b16 %v40
  %v318 = vunpack.c.h.b16 %v40
  %v319 = vunpack.c.l.b16 %v41
  %v320 = vunpack.c.h.b16 %v41
  %v321 = vunpack.c.l.b16 %v42
  %v322 = vunpack.c.h.b16 %v42
  %v323 = vunpack.c.l.b16 %v43
  %v324 = vunpack.c.h.b16 %v43
  %v325 = vunpack.c.l.b16 %v44
  %v326 = vunpack.c.h.b16 %v44
  %v327 = vunpack.c.l.b16 %v45
  %v328 = vunpack.c.h.b16 %v45
  %v329 = vunpack.c.l.b16 %v46
  %v330 = vunpack.c.h.b16 %v46
  %v331 = vunpack.c.l.b16 %v47
  %v332 = vunpack.c.h.b16 %v47
  %v333 = vunpack.c.l.b16 %v48
  %v334 = vunpack.c.h.b16 %v48
  %v335 = vunpack.c.l.b16 %v49
  %v336 = vunpack.c.h.b16 %v49
  %v337 = vunpack.c.l.b16 %v50
  %v338 = vunpack.c.h.b16 %v50
  %v339 = vunpack.c.l.b16 %v51
  %v340 = vunpack.c.h.b16 %v51
  %v341 = vunpack.c.l.b16 %v52
  %v342 = vunpack.c.h.b16 %v52
  %v343 = vunpack.c.l.b16 %v53
  %v344 = vunpack.c.h.b16 %v53
  %v345 = vunpack.c.l.b16 %v54
  %v346 = vunpack.c.h.b16 %v54
  %v347 = vunpack.c.l.b16 %v55
  %v348 = vunpack.c.h.b16 %v55
  %v349 = vunpack.c.l.b16 %v56
  %v350 = vunpack.c.h.b16 %v56
  %v351 = vunpack.c.l.b16 %v57
  %v352 = vunpack.c.h.b16 %v57
  %v353 = vunpack.c.l.b16 %v58
  %v354 = vunpack.c.h.b16 %v58
  %v355 = vunpack.c.l.b16 %v59
  %v356 = vunpack.c.h.b16 %v59
  %v357 = vunpack.c.l.b16 %v60
  %v358 = vunpack.c.h.b16 %v60
  %v359 = vunpack.c.l.b16 %v61
  %v360 = vunpack.c.h.b16 %v61
  %v361 = vunpack.c.l.b16 %v62
  %v362 = vunpack.c.h.b16 %v62
  %v363 = vunpack.c.l.b16 %v63
  %v364 = vunpack.c.h.b16 %v63
  %v365 = vunpack.c.l.b16 %v64
  %v366 = vunpack.c.h.b16 %v64
  %v367 = vunpack.c.l.b16 %v65
  %v368 = vunpack.c.h.b16 %v65
  %v369 = vunpack.c.l.b16 %v66
  %v370 = vunpack.c.h.b16 %v66
  %v371 = vunpack.c.l.b16 %v67
  %v372 = vunpack.c.h.b16 %v67
  %v373 = vunpack.c.l.b16 %v68
  %v374 = vunpack.c.h.b16 %v68
  %v375 = vunpack.c.l.b16 %v69
  %v376 = vunpack.c.h.b16 %v69
  %v377 = vunpack.c.l.b16 %v70
  %v378 = vunpack.c.h.b16 %v70
  %v379 = vunpack.c.l.b16 %v71
  %v380 = vunpack.c.h.b16 %v71
  %v381 = vunpack.c.l.b16 %v72
  %v382 = vunpack.c.h.b16 %v72
  %v383 = vunpack.c.l.b16 %v73
  %v384 = vunpack.c.h.b16 %v73
  %v385 = vunpack.c.l.b16 %v74
  %v386 = vunpack.c.h.b16 %v74
  %v387 = vunpack.c.l.b16 %v75
  %v388 = vunpack.c.h.b16 %v75
  %v389 = vunpack.c.l.b16 %v76
  %v390 = vunpack.c.h.b16 %v76
  %v391 = vunpack.c.l.b16 %v77
  %v392 = vunpack.c.h.b16 %v77
  %v393 = vunpack.c.l.b16 %v78
  %v394 = vunpack.c.h.b16 %v78
  %v395 = vunpack.c.l.b16 %v79
  %v396 = vunpack.c.h.b16 %v79
  %v397 = vunpack.c.l.b16 %v80
  %v398 = vunpack.c.h.b16 %v80
  %v399 = vunpack.c.l.b16 %v81
  %v400 = vunpack.c.h.b16 %v81
  %v401 = vunpack.c.l.b16 %v82
  %v402 = vunpack.c.h.b16 %v82
  %v403 = vunpack.c.l.b16 %v83
  %v404 = vunpack.c.h.b16 %v83
  %v405 = vunpack.c.l.b16 %v84
  %v406 = vunpack.c.h.b16 %v84
  %v407 = vunpack.c.l.b16 %v85
  %v408 = vunpack.c.h.b16 %v85
  %v409 = vunpack.c.l.b16 %v86
  %v410 = vunpack.c.h.b16 %v86
  %v411 = vunpack.c.l.b16 %v87
  %v412 = vunpack.c.h.b16 %v87
  %v413 = vunpack.c.l.b16 %v88
  %v414 = vunpack.c.h.b16 %v88
  %v415 = vunpack.c.l.b16 %v89
  %v416 = vunpack.c.h.b16 %v89
  %v417 = vunpack.c.l.b16 %v90
  %v418 = vunpack.c.h.b16 %v90
  %v419 = vunpack.c.l.b16 %v91
  %v420 = vunpack.c.h.b16 %v91
  %v421 = vunpack.c.l.b16 %v92
  %v422 = vunpack.c.h.b16 %v92
  %v423 = vunpack.c.l.b16 %v93
  %v424 = vunpack.c.h.b16 %v93
  %v425 = vunpack.c.l.b16 %v94
  %v426 = vunpack.c.h.b16 %v94
  %v427 = vunpack.c.l.b16 %v95
  %v428 = vunpack.c.h.b16 %v95
  %v429 = vunpack.c.l.b16 %v96
  %v430 = vunpack.c.h.b16 %v96
  %v431 = vunpack.c.l.b16 %v97
  %v432 = vunpack.c.h.b16 %v97
  %v433 = vunpack.c.l.b16 %v98
  %v434 = vunpack.c.h.b16 %v98
  %v435 = vunpack.c.l.b16 %v99
  %v436 = vunpack.c.h.b16 %v99
  %v437 = vunpack.c.l.b16 %v100
  %v438 = vunpack.c.h.b16 %v100
  %v439 = vunpack.c.l.b16 %v101
  %v440 = vunpack.c.h.b16 %v101
  %v441 = vunpack.c.l.b16 %v102
  %v442 = vunpack.c.h.b16 %v102
  %v443 = vunpack.c.l.b16 %v103
  %v444 = vunpack.c.h.b16 %v103
  %v445 = vunpack.c.l.b16 %v104
  %v446 = vunpack.c.h.b16 %v104
  %v447 = vunpack.c.l.b16 %v105
  %v448 = vunpack.c.h.b16 %v105
  %v449 = vunpack.c.l.b16 %v106
  %v450 = vunpack.c.h.b16 %v106
  %v451 = vunpack.c.l.b16 %v107
  %v452 = vunpack.c.h.b16 %v107
  %v453 = vunpack.c.l.b16 %v108
  %v454 = vunpack.c.h.b16 %v108
  %v455 = vunpack.c.l.b16 %v109
  %v456 = vunpack.c.h.b16 %v109
  %v457 = vunpack.c.l.b16 %v110
  %v458 = vunpack.c.h.b16 %v110
  %v459 = vunpack.c.l.b16 %v111
  %v460 = vunpack.c.h.b16 %v111
  %v461 = vunpack.c.l.b16 %v112
  %v462 = vunpack.c.h.b16 %v112
  %v463 = vunpack.c.l.b16 %v113
  %v464 = vunpack.c.h.b16 %v113
  %v465 = vunpack.c.l.b16 %v114
  %v466 = vunpack.c.h.b16 %v114
  %v467 = vunpack.c.l.b16 %v115
  %v468 = vunpack.c.h.b16 %v115
  %v469 = vunpack.c.l.b16 %v116
  %v470 = vunpack.c.h.b16 %v116
  %v471 = vunpack.c.l.b16 %v117
  %v472 = vunpack.c.h.b16 %v117
  %v473 = vunpack.c.l.b16 %v118
  %v474 = vunpack.c.h.b16 %v118
  %v475 = vunpack.c.l.b16 %v119
  %v476 = vunpack.c.h.b16 %v119
  %v477 = vunpack.c.l.b16 %v120
  %v478 = vunpack.c.h.b16 %v120
  %v479 = vunpack.c.l.b16 %v121
  %v480 = vunpack.c.h.b16 %v121
  %v481 = vunpack.c.l.b16 %v122
  %v482 = vunpack.c.h.b16 %v122
  %v483 = vunpack.c.l.b16 %v123
  %v484 = vunpack.c.h.b16 %v123
  %v485 = vunpack.c.l.b16 %v124
  %v486 = vunpack.c.h.b16 %v124
  %v487 = vunpack.c.l.b16 %v125
  %v488 = vunpack.c.h.b16 %v125
  %v489 = vunpack.c.l.b16 %v126
  %v490 = vunpack.c.h.b16 %v126
  %v491 = vunpack.c.l.b16 %v127
  %v492 = vunpack.c.h.b16 %v127
  %v493 = vunpack.c.l.b16 %v128
  %v494 = vunpack.c.h.b16 %v128
  %v495 = vunpack.c.l.b16 %v129
  %v496 = vunpack.c.h.b16 %v129
  %v497 = vunpack.c.l.b16 %v130
  %v498 = vunpack.c.h.b16 %v130
  %v499 = vunpack.c.l.b16 %v131
  %v500 = vunpack.c.h.b16 %v131
  %v501 = vunpack.c.l.b16 %v132
  %v502 = vunpack.c.h.b16 %v132
  %v503 = vunpack.c.l.b16 %v133
  %v504 = vunpack.c.h.b16 %v133
  %v505 = vunpack.c.l.b16 %v134
  %v506 = vunpack.c.h.b16 %v134
  %v507 = vunpack.c.l.b16 %v135
  %v508 = vunpack.c.h.b16 %v135
  %v509 = vunpack.c.l.b16 %v136
  %v510 = vunpack.c.h.b16 %v136
  %v511 = vunpack.c.l.b16 %v137
  %v512 = vunpack.c.h.b16 %v137
  %v513 = vunpack.c.l.b16 %v138
  %v514 = vunpack.c.h.b16 %v138
  %v515 = vunpack.c.l.b16 %v139
  %v516 = vunpack.c.h.b16 %v139
  %v517 = vunpack.c.l.b16 %v140
  %v518 = vunpack.c.h.b16 %v140
  %v519 = vunpack.c.l.b16 %v141
  %v520 = vunpack.c.h.b16 %v141
  %v521 = vunpack.c.l.b16 %v142
  %v522 = vunpack.c.h.b16 %v142
  %v523 = vunpack.c.l.b16 %v143
  %v524 = vunpack.c.h.b16 %v143
  %v525 = vunpack.c.l.b16 %v144
  %v526 = vunpack.c.h.b16 %v144
  %v527 = vunpack.c.l.b16 %v145
  %v528 = vunpack.c.h.b16 %v145
  %v529 = vunpack.c.l.b16 %v146
  %v530 = vunpack.c.h.b16 %v146
  %v531 = vpack.c.b16 %v309, %v307
  %v532 = vpack.c.b16 %v310, %v308
  %v533 = vpack.c.b16 %v313, %v311
  %v534 = vpack.c.b16 %v314, %v312
  %v535 = vpack.c.b16 %v317, %v315
  %v536 = vpack.c.b16 %v318, %v316
  %v537 = vpack.c.b16 %v321, %v319
  %v538 = vpack.c.b16 %v322, %v320
  %v539 = vpack.c.b16 %v325, %v323
  %v540 = vpack.c.b16 %v326, %v324
  %v541 = vpack.c.b16 %v329, %v327
  %v542 = vpack.c.b16 %v330, %v328
  %v543 = vpack.c.b16 %v333, %v331
  %v544 = vpack.c.b16 %v334, %v332
  %v545 = vpack.c.b16 %v337, %v335
  %v546 = vpack.c.b16 %v338, %v336
  %v547 = vpack.c.b16 %v341, %v339
  %v548 = vpack.c.b16 %v342, %v340
  %v549 = vpack.c.b16 %v345, %v343
  %v550 = vpack.c.b16 %v346, %v344
  %v551 = vpack.c.b16 %v349, %v347
  %v552 = vpack.c.b16 %v350, %v348
  %v553 = vpack.c.b16 %v353, %v351
  %v554 = vpack.c.b16 %v354, %v352
  %v555 = vpack.c.b16 %v357, %v355
  %v556 = vpack.c.b16 %v358, %v356
  %v557 = vpack.c.b16 %v361, %v359
  %v558 = vpack.c.b16 %v362, %v360
  %v559 = vpack.c.b16 %v365, %v363
  %v560 = vpack.c.b16 %v366, %v364
  %v561 = vpack.c.b16 %v369, %v367
  %v562 = vpack.c.b16 %v370, %v368
  %v563 = vpack.c.b16 %v373, %v371
  %v564 = vpack.c.b16 %v374, %v372
  %v565 = vpack.c.b16 %v377, %v375
  %v566 = vpack.c.b16 %v378, %v376
  %v567 = vpack.c.b16 %v381, %v379
  %v568 = vpack.c.b16 %v382, %v380
  %v569 = vpack.c.b16 %v385, %v383
  %v570 = vpack.c.b16 %v386, %v384
  %v571 = vpack.c.b16 %v389, %v387
  %v572 = vpack.c.b16 %v390, %v388
  %v573 = vpack.c.b16 %v393, %v391
  %v574 = vpack.c.b16 %v394, %v392
  %v575 = vpack.c.b16 %v397, %v395
  %v576 = vpack.c.b16 %v398, %v396
  %v577 = vpack.c.b16 %v401, %v399
  %v578 = vpack.c.b16 %v402, %v400
  %v579 = vpack.c.b16 %v405, %v403
  %v580 = vpack.c.b16 %v406, %v404
  %v581 = vpack.c.b16 %v409, %v407
  %v582 = vpack.c.b16 %v410, %v408
  %v583 = vpack.c.b16 %v413, %v411
  %v584 = vpack.c.b16 %v414, %v412
  %v585 = vpack.c.b16 %v417, %v415
  %v586 = vpack.c.b16 %v418, %v416
  %v587 = vpack.c.b16 %v421, %v419
  %v588 = vpack.c.b16 %v422, %v420
  %v589 = vpack.c.b16 %v425, %v423
  %v590 = vpack.c.b16 %v426, %v424
  %v591 = vpack.c.b16 %v429, %v427
  %v592 = vpack.c.b16 %v430, %v428
  %v593 = vpack.c.b16 %v433, %v431
  %v594 = vpack.c.b16 %v434, %v432
  %v595 = vpack.c.b16 %v437, %v435
  %v596 = vpack.c.b16 %v438, %v436
  %v597 = vpack.c.b16 %v441, %v439
  %v598 = vpack.c.b16 %v442, %v440
  %v599 = vpack.c.b16 %v445, %v443
  %v600 = vpack.c.b16 %v446, %v444
  %v601 = vpack.c.b16 %v449, %v447
  %v602 = vpack.c.b16 %v450, %v448
  %v603 = vpack.c.b16 %v453, %v451
  %v604 = vpack.c.b16 %v454, %v452
  %v605 = vpack.c.b16 %v457, %v455
  %v606 = vpack.c.b16 %v458, %v456
  %v607 = vpack.c.b16 %v461, %v459
  %v608 = vpack.c.b16 %v462, %v460
  %v609 = vpack.c.b16 %v465, %v463
  %v610 = vpack.c.b16 %v466, %v464
  %v611 = vpack.c.b16 %v469, %v467
  %v612 = vpack.c.b16 %v470, %v468
  %v613 = vpack.c.b16 %v473, %v471
  %v614 = vpack.c.b16 %v474, %v472
  %v615 = vpack.c.b16 %v477, %v475
  %v616 = vpack.c.b16 %v478, %v476
  %v617 = vpack.c.b16 %v481, %v479
  %v618 = vpack.c.b16 %v482, %v480
  %v619 = vpack.c.b16 %v485, %v483
  %v620 = vpack.c.b16 %v486, %v484
  %v621 = vpack.c.b16 %v489, %v487
  %v622 = vpack.c.b16 %v490, %v488
  %v623 = vpack.c.b16 %v493, %v491
  %v624 = vpack.c.b16 %v494, %v492
  %v625 = vpack.c.b16 %v497, %v495
  %v626 = vpack.c.b16 %v498, %v496
  %v627 = vpack.c.b16 %v501, %v499
  %v628 = vpack.c.b16 %v502, %v500
  %v629 = vpack.c.b16 %v505, %v503
  %v630 = vpack.c.b16 %v506, %v504
  %v631 = vpack.c.b16 %v509, %v507
  %v632 = vpack.c.b16 %v510, %v508
  %v633 = vpack.c.b16 %v513, %v511
  %v634 = vpack.c.b16 %v514, %v512
  %v635 = vpack.c.b16 %v517, %v515
  %v636 = vpack.c.b16 %v518, %v516
  %v637 = vpack.c.b16 %v521, %v519
  %v638 = vpack.c.b16 %v522, %v520
  %v639 = vpack.c.b16 %v525, %v523
  %v640 = vpack.c.b16 %v526, %v524
  %v641 = vpack.c.b16 %v529, %v527
  %v642 = vpack.c.b16 %v530, %v528
  %755 = vmatprep.subr.bf16.mxu0 %v546
  %756 = vmatpush1.bf16.msra.mxu0 %v545
  %757 = vmatprep.subr.bf16.mxu0 %v544
  %758 = vmatpush1.bf16.msra.mxu0 %v543
  %759 = vmatprep.subr.bf16.mxu0 %v542
  %760 = vmatpush1.bf16.msra.mxu0 %v541
  %761 = vmatprep.subr.bf16.mxu0 %v540
  %762 = vmatpush1.bf16.msra.mxu0 %v539
  %763 = vmatprep.subr.bf16.mxu0 %v538
  %764 = vmatpush1.bf16.msra.mxu0 %v537
  %765 = vmatprep.subr.bf16.mxu0 %v536
  %766 = vmatpush1.bf16.msra.mxu0 %v535
  %767 = vmatprep.subr.bf16.mxu0 %v534
  %768 = vmatpush1.bf16.msra.mxu0 %v533
  %769 = vmatprep.subr.bf16.mxu0 %v532
  %770 = vmatpush1.bf16.msra.mxu0 %v531
  %771 = vmatprep.subr.bf16.mxu0 %v562
  %772 = vmatpush2.bf16.msra.mxu0 %v561
  %773 = vmatprep.subr.bf16.mxu0 %v560
  %774 = vmatpush2.bf16.msra.mxu0 %v559
  %775 = vmatprep.subr.bf16.mxu0 %v558
  %776 = vmatpush2.bf16.msra.mxu0 %v557
  %777 = vmatprep.subr.bf16.mxu0 %v556
  %778 = vmatpush2.bf16.msra.mxu0 %v555
  %779 = vmatprep.subr.bf16.mxu0 %v554
  %780 = vmatpush2.bf16.msra.mxu0 %v553
  %781 = vmatprep.subr.bf16.mxu0 %v552
  %782 = vmatpush2.bf16.msra.mxu0 %v551
  %783 = vmatprep.subr.bf16.mxu0 %v550
  %784 = vmatpush2.bf16.msra.mxu0 %v549
  %785 = vmatprep.subr.bf16.mxu0 %v548
  %786 = vmatpush2.bf16.msra.mxu0 %v547
  %787 = vmatprep.mubr.bf16.mxu0 %v182
  %788 = vmatmul.mubr.bf16.gmra.mxu0 %v181
  %v789 = vpop.f32.mrf.mxu0
  %v790 = vadd.f32 %v152, %v789
  %v791 = vpop.f32.mrf.mxu0
  %v792 = vadd.f32 %v156, %v791
  %v793 = vpop.f32.mrf.mxu0
  %v794 = vadd.f32 %v152, %v793
  %v795 = vpop.f32.mrf.mxu0
  %v796 = vadd.f32 %v156, %v795
  %797 = vdwg.mxu0
  %798 = vmatprep.subr.bf16.mxu0 %v578
  %799 = vmatpush1.bf16.msra.mxu0 %v577
  %800 = vmatprep.subr.bf16.mxu0 %v576
  %801 = vmatpush1.bf16.msra.mxu0 %v575
  %802 = vmatprep.subr.bf16.mxu0 %v574
  %803 = vmatpush1.bf16.msra.mxu0 %v573
  %804 = vmatprep.subr.bf16.mxu0 %v572
  %805 = vmatpush1.bf16.msra.mxu0 %v571
  %806 = vmatprep.subr.bf16.mxu0 %v570
  %807 = vmatpush1.bf16.msra.mxu0 %v569
  %808 = vmatprep.subr.bf16.mxu0 %v568
  %809 = vmatpush1.bf16.msra.mxu0 %v567
  %810 = vmatprep.subr.bf16.mxu0 %v566
  %811 = vmatpush1.bf16.msra.mxu0 %v565
  %812 = vmatprep.subr.bf16.mxu0 %v564
  %813 = vmatpush1.bf16.msra.mxu0 %v563
  %814 = vmatprep.subr.bf16.mxu0 %v594
  %815 = vmatpush2.bf16.msra.mxu0 %v593
  %816 = vmatprep.subr.bf16.mxu0 %v592
  %817 = vmatpush2.bf16.msra.mxu0 %v591
  %818 = vmatprep.subr.bf16.mxu0 %v590
  %819 = vmatpush2.bf16.msra.mxu0 %v589
  %820 = vmatprep.subr.bf16.mxu0 %v588
  %821 = vmatpush2.bf16.msra.mxu0 %v587
  %822 = vmatprep.subr.bf16.mxu0 %v586
  %823 = vmatpush2.bf16.msra.mxu0 %v585
  %824 = vmatprep.subr.bf16.mxu0 %v584
  %825 = vmatpush2.bf16.msra.mxu0 %v583
  %826 = vmatprep.subr.bf16.mxu0 %v582
  %827 = vmatpush2.bf16.msra.mxu0 %v581
  %828 = vmatprep.subr.bf16.mxu0 %v580
  %829 = vmatpush2.bf16.msra.mxu0 %v579
  %830 = vmatprep.mubr.bf16.mxu0 %v184
  %831 = vmatmul.mubr.bf16.gmra.mxu0 %v183
  %v832 = vpop.f32.mrf.mxu0
  %v833 = vadd.f32 %v790, %v832
  %v834 = vpop.f32.mrf.mxu0
  %v835 = vadd.f32 %v792, %v834
  %v836 = vpop.f32.mrf.mxu0
  %v837 = vadd.f32 %v794, %v836
  %v838 = vpop.f32.mrf.mxu0
  %v839 = vadd.f32 %v796, %v838
  %840 = vdwg.mxu0
  %841 = vmatprep.subr.bf16.mxu0 %v610
  %842 = vmatpush1.bf16.msra.mxu0 %v609
  %843 = vmatprep.subr.bf16.mxu0 %v608
  %844 = vmatpush1.bf16.msra.mxu0 %v607
  %845 = vmatprep.subr.bf16.mxu0 %v606
  %846 = vmatpush1.bf16.msra.mxu0 %v605
  %847 = vmatprep.subr.bf16.mxu0 %v604
  %848 = vmatpush1.bf16.msra.mxu0 %v603
  %849 = vmatprep.subr.bf16.mxu0 %v602
  %850 = vmatpush1.bf16.msra.mxu0 %v601
  %851 = vmatprep.subr.bf16.mxu0 %v600
  %852 = vmatpush1.bf16.msra.mxu0 %v599
  %853 = vmatprep.subr.bf16.mxu0 %v598
  %854 = vmatpush1.bf16.msra.mxu0 %v597
  %855 = vmatprep.subr.bf16.mxu0 %v596
  %856 = vmatpush1.bf16.msra.mxu0 %v595
  %857 = vmatprep.subr.bf16.mxu0 %v626
  %858 = vmatpush2.bf16.msra.mxu0 %v625
  %859 = vmatprep.subr.bf16.mxu0 %v624
  %860 = vmatpush2.bf16.msra.mxu0 %v623
  %861 = vmatprep.subr.bf16.mxu0 %v622
  %862 = vmatpush2.bf16.msra.mxu0 %v621
  %863 = vmatprep.subr.bf16.mxu0 %v620
  %864 = vmatpush2.bf16.msra.mxu0 %v619
  %865 = vmatprep.subr.bf16.mxu0 %v618
  %866 = vmatpush2.bf16.msra.mxu0 %v617
  %867 = vmatprep.subr.bf16.mxu0 %v616
  %868 = vmatpush2.bf16.msra.mxu0 %v615
  %869 = vmatprep.subr.bf16.mxu0 %v614
  %870 = vmatpush2.bf16.msra.mxu0 %v613
  %871 = vmatprep.subr.bf16.mxu0 %v612
  %872 = vmatpush2.bf16.msra.mxu0 %v611
  %873 = vmatprep.mubr.bf16.mxu0 %v186
  %874 = vmatmul.mubr.bf16.gmra.mxu0 %v185
  %v875 = vpop.f32.mrf.mxu0
  %v876 = vadd.f32 %v833, %v875
  %v877 = vpop.f32.mrf.mxu0
  %v878 = vadd.f32 %v835, %v877
  %v879 = vpop.f32.mrf.mxu0
  %v880 = vadd.f32 %v837, %v879
  %v881 = vpop.f32.mrf.mxu0
  %v882 = vadd.f32 %v839, %v881
  %883 = vdwg.mxu0
  %884 = vmatprep.subr.bf16.mxu0 %v642
  %885 = vmatpush1.bf16.msra.mxu0 %v641
  %886 = vmatprep.subr.bf16.mxu0 %v640
  %887 = vmatpush1.bf16.msra.mxu0 %v639
  %888 = vmatprep.subr.bf16.mxu0 %v638
  %889 = vmatpush1.bf16.msra.mxu0 %v637
  %890 = vmatprep.subr.bf16.mxu0 %v636
  %891 = vmatpush1.bf16.msra.mxu0 %v635
  %892 = vmatprep.subr.bf16.mxu0 %v634
  %893 = vmatpush1.bf16.msra.mxu0 %v633
  %894 = vmatprep.subr.bf16.mxu0 %v632
  %895 = vmatpush1.bf16.msra.mxu0 %v631
  %896 = vmatprep.subr.bf16.mxu0 %v630
  %897 = vmatpush1.bf16.msra.mxu0 %v629
  %898 = vmatprep.subr.bf16.mxu0 %v628
  %899 = vmatpush1.bf16.msra.mxu0 %v627
  %900 = vmatprep.subr.bf16.mxu0 0
  %901 = vmatpush2.bf16.msra.mxu0 0
  %902 = vmatprep.subr.bf16.mxu0 0
  %903 = vmatpush2.bf16.msra.mxu0 0
  %904 = vmatprep.subr.bf16.mxu0 0
  %905 = vmatpush2.bf16.msra.mxu0 0
  %906 = vmatprep.subr.bf16.mxu0 0
  %907 = vmatpush2.bf16.msra.mxu0 0
  %908 = vmatprep.subr.bf16.mxu0 0
  %909 = vmatpush2.bf16.msra.mxu0 0
  %910 = vmatprep.subr.bf16.mxu0 0
  %911 = vmatpush2.bf16.msra.mxu0 0
  %912 = vmatprep.subr.bf16.mxu0 0
  %913 = vmatpush2.bf16.msra.mxu0 0
  %914 = vmatprep.subr.bf16.mxu0 0
  %915 = vmatpush2.bf16.msra.mxu0 0
  %916 = vmatprep.mubr.bf16.mxu0 0
  %917 = vmatmul.mubr.bf16.gmra.mxu0 %v187
  %v918 = vpop.f32.mrf.mxu0
  %v919 = vadd.f32 %v876, %v918
  %v920 = vpop.f32.mrf.mxu0
  %v921 = vadd.f32 %v878, %v920
  %v922 = vpop.f32.mrf.mxu0
  %v923 = vadd.f32 %v880, %v922
  %v924 = vpop.f32.mrf.mxu0
  %v925 = vadd.f32 %v882, %v924
  %926 = vdwg.mxu0
  %v927 = vmax.f32 %v919, 0.0
  %v928 = vmax.f32 %v921, 0.0
  %v929 = vmax.f32 %v923, 0.0
  %v930 = vmax.f32 %v925, 0.0
  %v931 = vpack.c.bf16 %v929, %v927
  %v932 = vpack.c.bf16 %v930, %v928
  %v933 = vld [vmem:[%s3] sm:$0xf]
  %v934 = vld [vmem:[%s3 + $0x4] sm:$0xf]
  %v935 = vld [vmem:[%s3 + $0x8] sm:$0xf]
  %v936 = vld [vmem:[%s3 + $0xc] sm:$0xf]
  %v937 = vld [vmem:[%s3 + $0x10] sm:$0xf]
  %v938 = vld [vmem:[%s3 + $0x14] sm:$0xf]
  %v939 = vld [vmem:[%s3 + $0x18] sm:$0xf]
  %v940 = vld [vmem:[%s3 + $0x1c] sm:$0xf]
  %v941 = vld [vmem:[%s3 + $0x20] sm:$0xf]
  %v942 = vld [vmem:[%s3 + $0x24] sm:$0xf]
  %v943 = vld [vmem:[%s3 + $0x28] sm:$0xf]
  %v944 = vld [vmem:[%s3 + $0x2c] sm:$0xf]
  %v945 = vld [vmem:[%s3 + $0x30] sm:$0xf]
  %v946 = vld [vmem:[%s3 + $0x34] sm:$0xf]
  %v947 = vld [vmem:[%s3 + $0x38] sm:$0xf]
  %v948 = vld [vmem:[%s3 + $0x3c] sm:$0xf]
  %v949 = vld [vmem:[%s3 + $0x40] sm:$0xf]
  %v950 = vld [vmem:[%s3 + $0x44] sm:$0xf]
  %v951 = vld [vmem:[%s3 + $0x48] sm:$0xf]
  %v952 = vld [vmem:[%s3 + $0x4c] sm:$0xf]
  %v953 = vld [vmem:[%s3 + $0x50] sm:$0xf]
  %v954 = vld [vmem:[%s3 + $0x54] sm:$0xf]
  %v955 = vld [vmem:[%s3 + $0x58] sm:$0xf]
  %v956 = vld [vmem:[%s3 + $0x5c] sm:$0xf]
  %v957 = vld [vmem:[%s3 + $0x60] sm:$0xf]
  %v958 = vld [vmem:[%s3 + $0x64] sm:$0xf]
  %v959 = vld [vmem:[%s3 + $0x68] sm:$0xf]
  %v960 = vld [vmem:[%s3 + $0x6c] sm:$0xf]
  %v961 = vld [vmem:[%s3 + $0x70] sm:$0xf]
  %v962 = vld [vmem:[%s3 + $0x74] sm:$0xf]
  %v963 = vld [vmem:[%s3 + $0x78] sm:$0xf]
  %v964 = vld [vmem:[%s3 + $0x7c] sm:$0xf]
  %v965 = vld [vmem:[%s4] sm:$0x1]
  %v967 = vlaneseq
  %v968 = vshrl.u32 %v967, 7
  %v969 = vsub.s32 0, %v968
  %v970 = vrot.slane %v965, %v969
  %v1004 = vunpack.c.l.b16 %v933
  %v1005 = vunpack.c.l.b16 %v934
  %v1006 = vunpack.c.l.b16 %v935
  %v1007 = vunpack.c.l.b16 %v936
  %v1008 = vunpack.c.l.b16 %v937
  %v1009 = vunpack.c.l.b16 %v938
  %v1010 = vunpack.c.l.b16 %v939
  %v1011 = vunpack.c.l.b16 %v940
  %v1012 = vunpack.c.l.b16 %v941
  %v1013 = vunpack.c.l.b16 %v942
  %v1014 = vunpack.c.l.b16 %v943
  %v1015 = vunpack.c.l.b16 %v944
  %v1016 = vunpack.c.l.b16 %v945
  %v1017 = vunpack.c.l.b16 %v946
  %v1018 = vunpack.c.l.b16 %v947
  %v1019 = vunpack.c.l.b16 %v948
  %v1020 = vunpack.c.l.b16 %v949
  %v1021 = vunpack.c.l.b16 %v950
  %v1022 = vunpack.c.l.b16 %v951
  %v1023 = vunpack.c.l.b16 %v952
  %v1024 = vunpack.c.l.b16 %v953
  %v1025 = vunpack.c.l.b16 %v954
  %v1026 = vunpack.c.l.b16 %v955
  %v1027 = vunpack.c.l.b16 %v956
  %v1028 = vunpack.c.l.b16 %v957
  %v1029 = vunpack.c.l.b16 %v958
  %v1030 = vunpack.c.l.b16 %v959
  %v1031 = vunpack.c.l.b16 %v960
  %v1032 = vunpack.c.l.b16 %v961
  %v1033 = vunpack.c.l.b16 %v962
  %v1034 = vunpack.c.l.b16 %v963
  %v1035 = vunpack.c.l.b16 %v964
  %v1036 = vpack.c.b16 %v1005, %v1004
  %v1037 = vpack.c.b16 %v1007, %v1006
  %v1038 = vpack.c.b16 %v1009, %v1008
  %v1039 = vpack.c.b16 %v1011, %v1010
  %v1040 = vpack.c.b16 %v1013, %v1012
  %v1041 = vpack.c.b16 %v1015, %v1014
  %v1042 = vpack.c.b16 %v1017, %v1016
  %v1043 = vpack.c.b16 %v1019, %v1018
  %v1044 = vpack.c.b16 %v1021, %v1020
  %v1045 = vpack.c.b16 %v1023, %v1022
  %v1046 = vpack.c.b16 %v1025, %v1024
  %v1047 = vpack.c.b16 %v1027, %v1026
  %v1048 = vpack.c.b16 %v1029, %v1028
  %v1049 = vpack.c.b16 %v1031, %v1030
  %v1050 = vpack.c.b16 %v1033, %v1032
  %v1051 = vpack.c.b16 %v1035, %v1034
  %1068 = vmatprep.subr.bf16.mxu0 0
  %1069 = vmatpush1.bf16.msra.mxu0 %v1043
  %1070 = vmatprep.subr.bf16.mxu0 0
  %1071 = vmatpush1.bf16.msra.mxu0 %v1042
  %1072 = vmatprep.subr.bf16.mxu0 0
  %1073 = vmatpush1.bf16.msra.mxu0 %v1041
  %1074 = vmatprep.subr.bf16.mxu0 0
  %1075 = vmatpush1.bf16.msra.mxu0 %v1040
  %1076 = vmatprep.subr.bf16.mxu0 0
  %1077 = vmatpush1.bf16.msra.mxu0 %v1039
  %1078 = vmatprep.subr.bf16.mxu0 0
  %1079 = vmatpush1.bf16.msra.mxu0 %v1038
  %1080 = vmatprep.subr.bf16.mxu0 0
  %1081 = vmatpush1.bf16.msra.mxu0 %v1037
  %1082 = vmatprep.subr.bf16.mxu0 0
  %1083 = vmatpush1.bf16.msra.mxu0 %v1036
  %1084 = vmatprep.subr.bf16.mxu0 0
  %1085 = vmatpush2.bf16.msra.mxu0 %v1051
  %1086 = vmatprep.subr.bf16.mxu0 0
  %1087 = vmatpush2.bf16.msra.mxu0 %v1050
  %1088 = vmatprep.subr.bf16.mxu0 0
  %1089 = vmatpush2.bf16.msra.mxu0 %v1049
  %1090 = vmatprep.subr.bf16.mxu0 0
  %1091 = vmatpush2.bf16.msra.mxu0 %v1048
  %1092 = vmatprep.subr.bf16.mxu0 0
  %1093 = vmatpush2.bf16.msra.mxu0 %v1047
  %1094 = vmatprep.subr.bf16.mxu0 0
  %1095 = vmatpush2.bf16.msra.mxu0 %v1046
  %1096 = vmatprep.subr.bf16.mxu0 0
  %1097 = vmatpush2.bf16.msra.mxu0 %v1045
  %1098 = vmatprep.subr.bf16.mxu0 0
  %1099 = vmatpush2.bf16.msra.mxu0 %v1044
  %1100 = vmatprep.mubr.bf16.mxu0 %v932
  %1101 = vmatmul.mubr.bf16.gmra.mxu0 %v931
  %v1102 = vpop.f32.mrf.mxu0
  %v1103 = vadd.f32 %v970, %v1102
  %v1104 = vpop.f32.mrf.mxu0
  %v1105 = vpop.f32.mrf.mxu0
  %v1106 = vadd.f32 %v970, %v1105
  %v1107 = vpop.f32.mrf.mxu0
  %1108 = vdwg.mxu0
  %v1109 = vmax.f32 %v1103, 0.0
  %v1110 = vmax.f32 %v1106, 0.0
  %v1111 = vpack.c.bf16 %v1110, %v1109
  %v1112 = vld [vmem:[%s5] sm:$0xf]
  %v1113 = vld [vmem:[%s5 + $0x4] sm:$0xf]
  %v1114 = vld [vmem:[%s5 + $0x8] sm:$0xf]
  %v1115 = vld [vmem:[%s5 + $0xc] sm:$0xf]
  %v1116 = vld [vmem:[%s5 + $0x10] sm:$0xf]
  %v1117 = vld [vmem:[%s5 + $0x14] sm:$0xf]
  %v1118 = vld [vmem:[%s5 + $0x18] sm:$0xf]
  %v1119 = vld [vmem:[%s5 + $0x1c] sm:$0xf]
  %v1120 = vld [vmem:[%s5 + $0x20] sm:$0xf]
  %v1121 = vld [vmem:[%s5 + $0x24] sm:$0xf]
  %v1122 = vld [vmem:[%s5 + $0x28] sm:$0xf]
  %v1123 = vld [vmem:[%s5 + $0x2c] sm:$0xf]
  %v1124 = vld [vmem:[%s5 + $0x30] sm:$0xf]
  %v1125 = vld [vmem:[%s5 + $0x34] sm:$0xf]
  %v1126 = vld [vmem:[%s5 + $0x38] sm:$0xf]
  %v1127 = vld [vmem:[%s5 + $0x3c] sm:$0xf]
  %v1128 = vld [vmem:[%s6] sm:$0x1]
  %v1130 = vlaneseq
  %v1131 = vshrl.u32 %v1130, 7
  %v1132 = vsub.s32 0, %v1131
  %v1133 = vrot.slane %v1128, %v1132
  %v1151 = vunpack.c.l.b16 %v1112
  %v1152 = vunpack.c.l.b16 %v1113
  %v1153 = vunpack.c.l.b16 %v1114
  %v1154 = vunpack.c.l.b16 %v1115
  %v1155 = vunpack.c.l.b16 %v1116
  %v1156 = vunpack.c.l.b16 %v1117
  %v1157 = vunpack.c.l.b16 %v1118
  %v1158 = vunpack.c.l.b16 %v1119
  %v1159 = vunpack.c.l.b16 %v1120
  %v1160 = vunpack.c.l.b16 %v1121
  %v1161 = vunpack.c.l.b16 %v1122
  %v1162 = vunpack.c.l.b16 %v1123
  %v1163 = vunpack.c.l.b16 %v1124
  %v1164 = vunpack.c.l.b16 %v1125
  %v1165 = vunpack.c.l.b16 %v1126
  %v1166 = vunpack.c.l.b16 %v1127
  %v1167 = vpack.c.b16 %v1152, %v1151
  %v1168 = vpack.c.b16 %v1154, %v1153
  %v1169 = vpack.c.b16 %v1156, %v1155
  %v1170 = vpack.c.b16 %v1158, %v1157
  %v1171 = vpack.c.b16 %v1160, %v1159
  %v1172 = vpack.c.b16 %v1162, %v1161
  %v1173 = vpack.c.b16 %v1164, %v1163
  %v1174 = vpack.c.b16 %v1166, %v1165
  %1183 = vmatprep.subr.bf16.mxu0 0
  %1184 = vmatpush1.bf16.msra.mxu0 %v1174
  %1185 = vmatprep.subr.bf16.mxu0 0
  %1186 = vmatpush1.bf16.msra.mxu0 %v1173
  %1187 = vmatprep.subr.bf16.mxu0 0
  %1188 = vmatpush1.bf16.msra.mxu0 %v1172
  %1189 = vmatprep.subr.bf16.mxu0 0
  %1190 = vmatpush1.bf16.msra.mxu0 %v1171
  %1191 = vmatprep.subr.bf16.mxu0 0
  %1192 = vmatpush1.bf16.msra.mxu0 %v1170
  %1193 = vmatprep.subr.bf16.mxu0 0
  %1194 = vmatpush1.bf16.msra.mxu0 %v1169
  %1195 = vmatprep.subr.bf16.mxu0 0
  %1196 = vmatpush1.bf16.msra.mxu0 %v1168
  %1197 = vmatprep.subr.bf16.mxu0 0
  %1198 = vmatpush1.bf16.msra.mxu0 %v1167
  %1199 = vmatprep.subr.bf16.mxu0 0
  %1200 = vmatpush2.bf16.msra.mxu0 0
  %1201 = vmatprep.subr.bf16.mxu0 0
  %1202 = vmatpush2.bf16.msra.mxu0 0
  %1203 = vmatprep.subr.bf16.mxu0 0
  %1204 = vmatpush2.bf16.msra.mxu0 0
  %1205 = vmatprep.subr.bf16.mxu0 0
  %1206 = vmatpush2.bf16.msra.mxu0 0
  %1207 = vmatprep.subr.bf16.mxu0 0
  %1208 = vmatpush2.bf16.msra.mxu0 0
  %1209 = vmatprep.subr.bf16.mxu0 0
  %1210 = vmatpush2.bf16.msra.mxu0 0
  %1211 = vmatprep.subr.bf16.mxu0 0
  %1212 = vmatpush2.bf16.msra.mxu0 0
  %1213 = vmatprep.subr.bf16.mxu0 0
  %1214 = vmatpush2.bf16.msra.mxu0 0
  %1215 = vmatprep.mubr.bf16.mxu0 0
  %1216 = vmatmul.mubr.bf16.gmra.mxu0 %v1111
  %v1217 = vpop.f32.mrf.mxu0
  %v1218 = vadd.f32 %v1133, %v1217
  %v1219 = vpop.f32.mrf.mxu0
  %v1220 = vpop.f32.mrf.mxu0
  %v1221 = vadd.f32 %v1133, %v1220
  %v1222 = vpop.f32.mrf.mxu0
  %1223 = vdwg.mxu0
  %1224 = vst [vmem:[%s7] sm:$0xff] %v1218
  %1225 = vst [vmem:[%s7 + $0x8] sm:$0xff] %v1221
  // Predicated region
  $region30: #{neural_network_forward.1} parent=0 // pred_check
    _
  $region31: #{neural_network_forward.1} parent=0 // pred_check_branch
    %1227 = sbr.rel (0) target = $region33
  $region32: #{neural_network_forward.1} parent=0 // pred_region
    _
  $region33: #{neural_network_forward.1} parent=0 // pred_fallthru
    _
  // Predicated region
  $region34: #{neural_network_forward.1} parent=0 // pred_check
    _
  $region35: #{neural_network_forward.1} parent=0 // pred_check_branch
    %1229 = sbr.rel (0) target = $region37
  $region36: #{neural_network_forward.1} parent=0 // pred_region
    _
  $region37: #{neural_network_forward.1} parent=0 // pred_fallthru
    _

</llo_original>
